<compile_context>
chip_gen: v7x
topology: tpu7x:2x2x1
jax: 0.10.0
libtpu: 0.0.40
codegen_flags: <defaults>
</compile_context>

<pallas_src>
import functools

import jax
import jax.numpy as jnp
from jax.experimental import pallas as pl
from jax.experimental.pallas import tpu as pltpu

_LANE = 128   # padded feature width (all layer dims here are <= 128)
_SUB = 8      # sublane multiple / rows reserved per bias segment


def _make_mlp_kernel(num_layers):
    """Kernel over one batch tile: split-first-layer MLP read from a packed slab.

    Slab row layout (all lane-padded to 128, all offsets sublane-aligned):
      [0      , 128)        W0a   (weight rows belonging to arg_1 features)
      [128    , 256)        W0b   (weight rows belonging to arg_2 features)
      [256    , 264)        b0    (row 0 holds the bias, rest zero)
      then per layer li = 1 .. num_layers-1:
      [off        , off+128)      W_li
      [off+128    , off+136)      b_li
    """

    def kernel(a_ref, b_ref, slab_ref, out_ref):
        w0a = slab_ref[0:_LANE, :]
        w0b = slab_ref[_LANE:2 * _LANE, :]
        bias0 = slab_ref[2 * _LANE:2 * _LANE + 1, :]       # (1, 128) broadcasts

        # torch.cat((arg_1, arg_2), dim=1) @ W0  ==  arg_1 @ W0a + arg_2 @ W0b
        h = (jnp.dot(a_ref[...], w0a, preferred_element_type=jnp.float32)
             + jnp.dot(b_ref[...], w0b, preferred_element_type=jnp.float32)
             + bias0)
        if num_layers > 1:
            h = jnp.maximum(h, 0.0)                        # ReLU

        off = 2 * _LANE + _SUB
        for li in range(1, num_layers):
            w = slab_ref[off:off + _LANE, :]
            bias = slab_ref[off + _LANE:off + _LANE + 1, :]
            h = jnp.dot(h, w, preferred_element_type=jnp.float32) + bias
            if li < num_layers - 1:
                h = jnp.maximum(h, 0.0)
            off += _LANE + _SUB

        out_ref[...] = h.astype(out_ref.dtype)

    return kernel


def _round_up(x, m):
    return -(-x // m) * m


@jax.jit
def _multi_arg_regression_call(arg_1, arg_2, params_flat):
    num_layers = len(params_flat) // 2
    batch, d_a = arg_1.shape
    _, d_b = arg_2.shape
    out_dim = params_flat[-1].shape[-1]

    dims = [d_a + d_b] + [w.shape[1] for w in params_flat[0::2]]
    assert max(dims) <= _LANE, "this packing scheme assumes layer dims <= 128"

    # ---- batch padding / tiling -------------------------------------------
    tb = min(_round_up(batch, _SUB), 512)       # batch tile, multiple of 8
    b_pad = _round_up(batch, tb)

    a_p = jnp.zeros((b_pad, _LANE), jnp.float32).at[:batch, :d_a].set(arg_1)
    b_p = jnp.zeros((b_pad, _LANE), jnp.float32).at[:batch, :d_b].set(arg_2)

    # ---- pack all params into one lane-dense, sublane-aligned slab --------
    total_rows = 2 * _LANE + _SUB + (num_layers - 1) * (_LANE + _SUB)
    slab = jnp.zeros((total_rows, _LANE), jnp.float32)

    w0, bias0 = params_flat[0], params_flat[1]
    h0 = w0.shape[1]
    slab = slab.at[0:d_a, :h0].set(w0[:d_a])                 # W0a
    slab = slab.at[_LANE:_LANE + d_b, :h0].set(w0[d_a:])     # W0b
    slab = slab.at[2 * _LANE:2 * _LANE + 1, :h0].set(bias0.reshape(1, -1))

    off = 2 * _LANE + _SUB
    for li in range(1, num_layers):
        w, b = params_flat[2 * li], params_flat[2 * li + 1]
        slab = slab.at[off:off + w.shape[0], :w.shape[1]].set(w)
        slab = slab.at[off + _LANE:off + _LANE + 1, :w.shape[1]].set(
            b.reshape(1, -1))
        off += _LANE + _SUB

    # ---- pallas call -------------------------------------------------------
    kernel = _make_mlp_kernel(num_layers)
    grid = (b_pad // tb,)

    out = pl.pallas_call(
        kernel,
        out_shape=jax.ShapeDtypeStruct((b_pad, _LANE), jnp.float32),
        grid=grid,
        in_specs=[
            pl.BlockSpec((tb, _LANE), lambda i: (i, 0)),          # arg_1 tile
            pl.BlockSpec((tb, _LANE), lambda i: (i, 0)),          # arg_2 tile
            pl.BlockSpec((total_rows, _LANE), lambda i: (0, 0)),  # param slab
        ],
        out_specs=pl.BlockSpec((tb, _LANE), lambda i: (i, 0)),
        compiler_params=pltpu.CompilerParams(
            dimension_semantics=("parallel",),
        ),
    )(a_p, b_p, slab)

    return out[:batch, :out_dim]


def init_params(key, layers):
    """Deterministic parameter init mimicking torch.nn.Linear shapes.

    Returns a flat list [W0, b0, W1, b1, ...] with W_i of shape
    (layers[i], layers[i+1]) and b_i of shape (1, layers[i+1]).
    """
    params = []
    for i in range(len(layers) - 1):
        key, kw, kb = jax.random.split(key, 3)
        fan_in = layers[i]
        bound = 1.0 / jnp.sqrt(jnp.float32(fan_in))
        w = jax.random.uniform(
            kw, (layers[i], layers[i + 1]), jnp.float32, -bound, bound
        )
        b = jax.random.uniform(kb, (1, layers[i + 1]), jnp.float32, -bound, bound)
        params.extend([w, b])
    return params


def multi_arg_regression(arg_1, arg_2, params_flat):
    return _multi_arg_regression_call(arg_1, arg_2, tuple(params_flat))


def _reference(arg_1, arg_2, params_flat):
    """Pure-JAX reference for correctness check."""
    h = jnp.concatenate([arg_1, arg_2], axis=1)
    num_layers = len(params_flat) // 2
    for li in range(num_layers):
        w, b = params_flat[2 * li], params_flat[2 * li + 1]
        h = h @ w + b
        if li < num_layers - 1:
            h = jnp.maximum(h, 0.0)
    return h


if __name__ == "__main__":
    # layers = [8, 32, 32, 4]: input dim 8 (two concatenated 4-feature args),
    # two hidden layers of 32 (with ReLU), output dim 4.
    layers = [8, 32, 32, 4]
    batch = 2

    key = jax.random.PRNGKey(0)
    key, k1, k2, kp = jax.random.split(key, 4)
    arg_1 = jax.random.normal(k1, (batch, 4), jnp.float32)
    arg_2 = jax.random.normal(k2, (batch, 4), jnp.float32)
    params = init_params(kp, layers)

    out = multi_arg_regression(arg_1, arg_2, params)
    out = jax.block_until_ready(out)

    ref = _reference(arg_1, arg_2, params)
    assert out.shape == (batch, layers[-1]), out.shape
    assert jnp.allclose(out, ref, atol=1e-5, rtol=1e-5), (out, ref)

    print("KERNEL_OK")
</pallas_src>

<mosaic_0001>
module attributes {stable_mosaic.version = 11 : i64} {
  func.func @kernel(%arg0: i32, %arg1: memref<8x128xf32, #tpu.memory_space<vmem>>, %arg2: memref<8x128xf32, #tpu.memory_space<vmem>>, %arg3: memref<536x128xf32, #tpu.memory_space<vmem>>, %arg4: memref<8x128xf32, #tpu.memory_space<vmem>>) attributes {dimension_semantics = [#tpu.dimension_semantics<parallel>], iteration_bounds = array<i64: 1>, scalar_prefetch = 0 : i64, scratch_operands = 0 : i64, tpu.core_type = #tpu.core_type<tc>, window_params = [{transform_indices = @transform_0, window_bounds = array<i64: 8, 128>}, {transform_indices = @transform_1, window_bounds = array<i64: 8, 128>}, {pipeline_mode = #tpu.pipeline_mode<synchronous>, transform_indices = @transform_2, window_bounds = array<i64: 536, 128>}, {transform_indices = @transform_3, window_bounds = array<i64: 8, 128>}]} {
    %c0 = arith.constant 0 : index
    %c0_0 = arith.constant 0 : index
    %0 = vector.load %arg3[%c0, %c0_0] : memref<536x128xf32, #tpu.memory_space<vmem>>, vector<128x128xf32>
    %c128 = arith.constant 128 : index
    %c0_1 = arith.constant 0 : index
    %1 = vector.load %arg3[%c128, %c0_1] : memref<536x128xf32, #tpu.memory_space<vmem>>, vector<128x128xf32>
    %c256 = arith.constant 256 : index
    %c0_2 = arith.constant 0 : index
    %2 = vector.load %arg3[%c256, %c0_2] : memref<536x128xf32, #tpu.memory_space<vmem>>, vector<1x128xf32>
    %c0_3 = arith.constant 0 : index
    %c0_4 = arith.constant 0 : index
    %3 = vector.load %arg1[%c0_3, %c0_4] : memref<8x128xf32, #tpu.memory_space<vmem>>, vector<8x128xf32>
    %cst = arith.constant dense<0.000000e+00> : vector<8x128xf32>
    %4 = tpu.matmul %3, %0, %cst {dimension_numbers = #tpu.dot_dimension_numbers<[1], [0], [0], [1], [0, 0, 1, 1], [], []>} : vector<8x128xf32>, vector<128x128xf32>, vector<8x128xf32> -> vector<8x128xf32>
    %c0_5 = arith.constant 0 : index
    %c0_6 = arith.constant 0 : index
    %5 = vector.load %arg2[%c0_5, %c0_6] : memref<8x128xf32, #tpu.memory_space<vmem>>, vector<8x128xf32>
    %cst_7 = arith.constant dense<0.000000e+00> : vector<8x128xf32>
    %6 = tpu.matmul %5, %1, %cst_7 {dimension_numbers = #tpu.dot_dimension_numbers<[1], [0], [0], [1], [0, 0, 1, 1], [], []>} : vector<8x128xf32>, vector<128x128xf32>, vector<8x128xf32> -> vector<8x128xf32>
    %7 = arith.addf %4, %6 : vector<8x128xf32>
    %8 = vector.broadcast %2 : vector<1x128xf32> to vector<8x128xf32>
    %9 = arith.addf %7, %8 : vector<8x128xf32>
    %cst_8 = arith.constant 0.000000e+00 : f32
    %10 = vector.broadcast %cst_8 : f32 to vector<8x128xf32>
    %11 = arith.maximumf %9, %10 : vector<8x128xf32>
    %c264 = arith.constant 264 : index
    %c0_9 = arith.constant 0 : index
    %12 = vector.load %arg3[%c264, %c0_9] : memref<536x128xf32, #tpu.memory_space<vmem>>, vector<128x128xf32>
    %c392 = arith.constant 392 : index
    %c0_10 = arith.constant 0 : index
    %13 = vector.load %arg3[%c392, %c0_10] : memref<536x128xf32, #tpu.memory_space<vmem>>, vector<1x128xf32>
    %cst_11 = arith.constant dense<0.000000e+00> : vector<8x128xf32>
    %14 = tpu.matmul %11, %12, %cst_11 {dimension_numbers = #tpu.dot_dimension_numbers<[1], [0], [0], [1], [0, 0, 1, 1], [], []>} : vector<8x128xf32>, vector<128x128xf32>, vector<8x128xf32> -> vector<8x128xf32>
    %15 = vector.broadcast %13 : vector<1x128xf32> to vector<8x128xf32>
    %16 = arith.addf %14, %15 : vector<8x128xf32>
    %cst_12 = arith.constant 0.000000e+00 : f32
    %17 = vector.broadcast %cst_12 : f32 to vector<8x128xf32>
    %18 = arith.maximumf %16, %17 : vector<8x128xf32>
    %c400 = arith.constant 400 : index
    %c0_13 = arith.constant 0 : index
    %19 = vector.load %arg3[%c400, %c0_13] : memref<536x128xf32, #tpu.memory_space<vmem>>, vector<128x128xf32>
    %c528 = arith.constant 528 : index
    %c0_14 = arith.constant 0 : index
    %20 = vector.load %arg3[%c528, %c0_14] : memref<536x128xf32, #tpu.memory_space<vmem>>, vector<1x128xf32>
    %cst_15 = arith.constant dense<0.000000e+00> : vector<8x128xf32>
    %21 = tpu.matmul %18, %19, %cst_15 {dimension_numbers = #tpu.dot_dimension_numbers<[1], [0], [0], [1], [0, 0, 1, 1], [], []>} : vector<8x128xf32>, vector<128x128xf32>, vector<8x128xf32> -> vector<8x128xf32>
    %22 = vector.broadcast %20 : vector<1x128xf32> to vector<8x128xf32>
    %23 = arith.addf %21, %22 : vector<8x128xf32>
    %c0_16 = arith.constant 0 : index
    %c0_17 = arith.constant 0 : index
    %24 = vector.load %arg4[%c0_16, %c0_17] : memref<8x128xf32, #tpu.memory_space<vmem>>, vector<8x128xf32>
    tpu.vector_store %arg4[%c0_16, %c0_17], %23 {strides = array<i32>} : memref<8x128xf32, #tpu.memory_space<vmem>>, vector<8x128xf32>,
    return
  }
  func.func @transform_0(%arg0: i32) -> (i32, i32) {
    %c0_i32 = arith.constant 0 : i32
    %c0_i32_0 = arith.constant 0 : i32
    return %arg0, %c0_i32 : i32, i32
  }
  func.func @transform_1(%arg0: i32) -> (i32, i32) {
    %c0_i32 = arith.constant 0 : i32
    %c0_i32_0 = arith.constant 0 : i32
    return %arg0, %c0_i32 : i32, i32
  }
  func.func @transform_2(%arg0: i32) -> (i32, i32) {
    %c0_i32 = arith.constant 0 : i32
    %c0_i32_0 = arith.constant 0 : i32
    %c0_i32_1 = arith.constant 0 : i32
    return %c0_i32, %c0_i32_0 : i32, i32
  }
  func.func @transform_3(%arg0: i32) -> (i32, i32) {
    %c0_i32 = arith.constant 0 : i32
    %c0_i32_0 = arith.constant 0 : i32
    return %arg0, %c0_i32 : i32, i32
  }
}

</mosaic_0001>

<llo_original>
// kernel: _multi_arg_regression_call.1
$region0: #{_multi_arg_regression_call.1}
  #allocation0 [shape = 'u32[]', space=smem, size = 0x4, offset = 0x4, fixed_abs, tag = 'smem constant byte address 0x4 - core index']
  #allocation1 [shape = 'u32[144,128]{1,0:T(1,128)}', space=vmem, size = 0x12000, scoped, tag = 'internal scratch']
  %s0 = inlined_call_operand.vmem [shape: f32[8,128], index: 0, kind: input, shape index: {}]
  %s1 = inlined_call_operand.vmem [shape: f32[8,128], index: 1, kind: input, shape index: {}]
  %s2 = inlined_call_operand.vmem [shape: f32[536,128], index: 2, kind: input, shape index: {}]
  %s3 = inlined_call_operand.vmem [shape: f32[8,128], index: 3, kind: output, shape index: {}]
  %s4 = sld [smem:[#allocation0]]
  $region22: #{_multi_arg_regression_call.1} parent=0
    _
  %s6 = ssub.s32 1, %s4
  %s7 = scalar_select 0, %s6, %s4
  // Predicated region
  $region2: #{_multi_arg_regression_call.1} parent=0 // pred_check
    _
  $region3: #{_multi_arg_regression_call.1} parent=0 // pred_check_branch
    %9 = sbr.rel (0) target = $region5
  $region4: #{_multi_arg_regression_call.1} parent=0 // pred_region
    _
  $region5: #{_multi_arg_regression_call.1} parent=0 // pred_fallthru
    _
  // Predicated region
  $region6: #{_multi_arg_regression_call.1} parent=0 // pred_check
    _
  $region7: #{_multi_arg_regression_call.1} parent=0 // pred_check_branch
    %11 = sbr.rel (0) target = $region9
  $region8: #{_multi_arg_regression_call.1} parent=0 // pred_region
    _
  $region9: #{_multi_arg_regression_call.1} parent=0 // pred_fallthru
    _
  // Predicated region
  $region10: #{_multi_arg_regression_call.1} parent=0 // pred_check
    _
  $region11: #{_multi_arg_regression_call.1} parent=0 // pred_check_branch
    %13 = sbr.rel (0) target = $region13
  $region12: #{_multi_arg_regression_call.1} parent=0 // pred_region
    _
  $region13: #{_multi_arg_regression_call.1} parent=0 // pred_fallthru
    _
  %v14 = vld [vmem:[%s2] sm:$0xff]
  %v15 = vld [vmem:[%s2 + $0x8] sm:$0xff]
  %v16 = vld [vmem:[%s2 + $0x10] sm:$0xff]
  %v17 = vld [vmem:[%s2 + $0x18] sm:$0xff]
  %v18 = vld [vmem:[%s2 + $0x20] sm:$0xff]
  %v19 = vld [vmem:[%s2 + $0x28] sm:$0xff]
  %v20 = vld [vmem:[%s2 + $0x30] sm:$0xff]
  %v21 = vld [vmem:[%s2 + $0x38] sm:$0xff]
  %v22 = vld [vmem:[%s2 + $0x40] sm:$0xff]
  %v23 = vld [vmem:[%s2 + $0x48] sm:$0xff]
  %v24 = vld [vmem:[%s2 + $0x50] sm:$0xff]
  %v25 = vld [vmem:[%s2 + $0x58] sm:$0xff]
  %v26 = vld [vmem:[%s2 + $0x60] sm:$0xff]
  %v27 = vld [vmem:[%s2 + $0x68] sm:$0xff]
  %v28 = vld [vmem:[%s2 + $0x70] sm:$0xff]
  %v29 = vld [vmem:[%s2 + $0x78] sm:$0xff]
  %v30 = vld [vmem:[%s2 + $0x80] sm:$0xff]
  %v31 = vld [vmem:[%s2 + $0x88] sm:$0xff]
  %v32 = vld [vmem:[%s2 + $0x90] sm:$0xff]
  %v33 = vld [vmem:[%s2 + $0x98] sm:$0xff]
  %v34 = vld [vmem:[%s2 + $0xa0] sm:$0xff]
  %v35 = vld [vmem:[%s2 + $0xa8] sm:$0xff]
  %v36 = vld [vmem:[%s2 + $0xb0] sm:$0xff]
  %v37 = vld [vmem:[%s2 + $0xb8] sm:$0xff]
  %v38 = vld [vmem:[%s2 + $0xc0] sm:$0xff]
  %v39 = vld [vmem:[%s2 + $0xc8] sm:$0xff]
  %v40 = vld [vmem:[%s2 + $0xd0] sm:$0xff]
  %v41 = vld [vmem:[%s2 + $0xd8] sm:$0xff]
  %v42 = vld [vmem:[%s2 + $0xe0] sm:$0xff]
  %v43 = vld [vmem:[%s2 + $0xe8] sm:$0xff]
  %v44 = vld [vmem:[%s2 + $0xf0] sm:$0xff]
  %v45 = vld [vmem:[%s2 + $0xf8] sm:$0xff]
  %v46 = vld [vmem:[%s2 + $0x100] sm:$0x1]
  %v47 = vld [vmem:[%s0] sm:$0xff]
  %v48 = vld [vmem:[%s1] sm:$0xff]
  %49 = vmatprep.subr.mxu0 0.0
  %50 = vmatpush1.msra.mxu0 %v30
  %51 = vmatprep.subr.mxu0 0.0
  %52 = vmatpush1.msra.mxu0 %v31
  %53 = vmatprep.subr.mxu0 0.0
  %54 = vmatpush1.msra.mxu0 %v32
  %55 = vmatprep.subr.mxu0 0.0
  %56 = vmatpush1.msra.mxu0 %v33
  %57 = vmatprep.subr.mxu0 0.0
  %58 = vmatpush1.msra.mxu0 %v34
  %59 = vmatprep.subr.mxu0 0.0
  %60 = vmatpush1.msra.mxu0 %v35
  %61 = vmatprep.subr.mxu0 0.0
  %62 = vmatpush1.msra.mxu0 %v36
  %63 = vmatprep.subr.mxu0 0.0
  %64 = vmatpush1.msra.mxu0 %v37
  %65 = vmatprep.subr.mxu0 0.0
  %66 = vmatpush1.msra.mxu0 %v38
  %67 = vmatprep.subr.mxu0 0.0
  %68 = vmatpush1.msra.mxu0 %v39
  %69 = vmatprep.subr.mxu0 0.0
  %70 = vmatpush1.msra.mxu0 %v40
  %71 = vmatprep.subr.mxu0 0.0
  %72 = vmatpush1.msra.mxu0 %v41
  %73 = vmatprep.subr.mxu0 0.0
  %74 = vmatpush1.msra.mxu0 %v42
  %75 = vmatprep.subr.mxu0 0.0
  %76 = vmatpush1.msra.mxu0 %v43
  %77 = vmatprep.subr.mxu0 0.0
  %78 = vmatpush1.msra.mxu0 %v44
  %79 = vmatprep.subr.mxu0 0.0
  %80 = vmatpush1.msra.mxu0 %v45
  %81 = vmatprep.subr.mxu0 0.0
  %82 = vmatpush1.msra.mxu0 0.0
  %83 = vmatprep.subr.mxu0 0.0
  %84 = vmatpush1.msra.mxu0 0.0
  %85 = vmatprep.subr.mxu0 0.0
  %86 = vmatpush1.msra.mxu0 0.0
  %87 = vmatprep.subr.mxu0 0.0
  %88 = vmatpush1.msra.mxu0 0.0
  %89 = vmatprep.subr.mxu0 0.0
  %90 = vmatpush1.msra.mxu0 0.0
  %91 = vmatprep.subr.mxu0 0.0
  %92 = vmatpush1.msra.mxu0 0.0
  %93 = vmatprep.subr.mxu0 0.0
  %94 = vmatpush1.msra.mxu0 0.0
  %95 = vmatprep.subr.mxu0 0.0
  %96 = vmatpush1.msra.mxu0 0.0
  %97 = vmatprep.subr.mxu0 0.0
  %98 = vmatpush1.msra.mxu0 0.0
  %99 = vmatprep.subr.mxu0 0.0
  %100 = vmatpush1.msra.mxu0 0.0
  %101 = vmatprep.subr.mxu0 0.0
  %102 = vmatpush1.msra.mxu0 0.0
  %103 = vmatprep.subr.mxu0 0.0
  %104 = vmatpush1.msra.mxu0 0.0
  %105 = vmatprep.subr.mxu0 0.0
  %106 = vmatpush1.msra.mxu0 0.0
  %107 = vmatprep.subr.mxu0 0.0
  %108 = vmatpush1.msra.mxu0 0.0
  %109 = vmatprep.subr.mxu0 0.0
  %110 = vmatpush1.msra.mxu0 0.0
  %111 = vmatprep.subr.mxu0 0.0
  %112 = vmatpush1.msra.mxu0 0.0
  %113 = vmatprep.mubr.f32.mxu0 0.0
  %114 = vmatmul.mubr.f32.gmra.mrb[0].mxu0 %v48
  %v115 = vpop.f32.mrb[0].mxu0
  %v116 = vadd.f32 0.0, %v115
  %v117 = vpop.f32.mrb[0].mxu0
  %118 = vdwg.mxu0
  %119 = vmatprep.subr.mxu0 0.0
  %120 = vmatpush1.msra.mxu0 %v14
  %121 = vmatprep.subr.mxu0 0.0
  %122 = vmatpush1.msra.mxu0 %v15
  %123 = vmatprep.subr.mxu0 0.0
  %124 = vmatpush1.msra.mxu0 %v16
  %125 = vmatprep.subr.mxu0 0.0
  %126 = vmatpush1.msra.mxu0 %v17
  %127 = vmatprep.subr.mxu0 0.0
  %128 = vmatpush1.msra.mxu0 %v18
  %129 = vmatprep.subr.mxu0 0.0
  %130 = vmatpush1.msra.mxu0 %v19
  %131 = vmatprep.subr.mxu0 0.0
  %132 = vmatpush1.msra.mxu0 %v20
  %133 = vmatprep.subr.mxu0 0.0
  %134 = vmatpush1.msra.mxu0 %v21
  %135 = vmatprep.subr.mxu0 0.0
  %136 = vmatpush1.msra.mxu0 %v22
  %137 = vmatprep.subr.mxu0 0.0
  %138 = vmatpush1.msra.mxu0 %v23
  %139 = vmatprep.subr.mxu0 0.0
  %140 = vmatpush1.msra.mxu0 %v24
  %141 = vmatprep.subr.mxu0 0.0
  %142 = vmatpush1.msra.mxu0 %v25
  %143 = vmatprep.subr.mxu0 0.0
  %144 = vmatpush1.msra.mxu0 %v26
  %145 = vmatprep.subr.mxu0 0.0
  %146 = vmatpush1.msra.mxu0 %v27
  %147 = vmatprep.subr.mxu0 0.0
  %148 = vmatpush1.msra.mxu0 %v28
  %149 = vmatprep.subr.mxu0 0.0
  %150 = vmatpush1.msra.mxu0 %v29
  %151 = vmatprep.subr.mxu0 0.0
  %152 = vmatpush1.msra.mxu0 0.0
  %153 = vmatprep.subr.mxu0 0.0
  %154 = vmatpush1.msra.mxu0 0.0
  %155 = vmatprep.subr.mxu0 0.0
  %156 = vmatpush1.msra.mxu0 0.0
  %157 = vmatprep.subr.mxu0 0.0
  %158 = vmatpush1.msra.mxu0 0.0
  %159 = vmatprep.subr.mxu0 0.0
  %160 = vmatpush1.msra.mxu0 0.0
  %161 = vmatprep.subr.mxu0 0.0
  %162 = vmatpush1.msra.mxu0 0.0
  %163 = vmatprep.subr.mxu0 0.0
  %164 = vmatpush1.msra.mxu0 0.0
  %165 = vmatprep.subr.mxu0 0.0
  %166 = vmatpush1.msra.mxu0 0.0
  %167 = vmatprep.subr.mxu0 0.0
  %168 = vmatpush1.msra.mxu0 0.0
  %169 = vmatprep.subr.mxu0 0.0
  %170 = vmatpush1.msra.mxu0 0.0
  %171 = vmatprep.subr.mxu0 0.0
  %172 = vmatpush1.msra.mxu0 0.0
  %173 = vmatprep.subr.mxu0 0.0
  %174 = vmatpush1.msra.mxu0 0.0
  %175 = vmatprep.subr.mxu0 0.0
  %176 = vmatpush1.msra.mxu0 0.0
  %177 = vmatprep.subr.mxu0 0.0
  %178 = vmatpush1.msra.mxu0 0.0
  %179 = vmatprep.subr.mxu0 0.0
  %180 = vmatpush1.msra.mxu0 0.0
  %181 = vmatprep.subr.mxu0 0.0
  %182 = vmatpush1.msra.mxu0 0.0
  %183 = vmatprep.mubr.f32.mxu0 0.0
  %184 = vmatmul.mubr.f32.gmra.mrb[0].mxu0 %v47
  %v185 = vpop.f32.mrb[0].mxu0
  %v186 = vadd.f32 %v116, %v185
  %v187 = vpop.f32.mrb[0].mxu0
  %188 = vdwg.mxu0
  %v189 = vlaneseq
  %v190 = vshrl.u32 %v189, 7
  %v191 = vsub.s32 0, %v190
  %v192 = vrot.slane %v46, %v191
  %v193 = vadd.f32 %v186, %v192
  %v194 = vmax.f32 %v193, 0.0
  %v195 = vld [vmem:[%s2 + $0x108] sm:$0xff]
  %v196 = vld [vmem:[%s2 + $0x110] sm:$0xff]
  %v197 = vld [vmem:[%s2 + $0x118] sm:$0xff]
  %v198 = vld [vmem:[%s2 + $0x120] sm:$0xff]
  %v199 = vld [vmem:[%s2 + $0x128] sm:$0xff]
  %v200 = vld [vmem:[%s2 + $0x130] sm:$0xff]
  %v201 = vld [vmem:[%s2 + $0x138] sm:$0xff]
  %v202 = vld [vmem:[%s2 + $0x140] sm:$0xff]
  %v203 = vld [vmem:[%s2 + $0x148] sm:$0xff]
  %v204 = vld [vmem:[%s2 + $0x150] sm:$0xff]
  %v205 = vld [vmem:[%s2 + $0x158] sm:$0xff]
  %v206 = vld [vmem:[%s2 + $0x160] sm:$0xff]
  %v207 = vld [vmem:[%s2 + $0x168] sm:$0xff]
  %v208 = vld [vmem:[%s2 + $0x170] sm:$0xff]
  %v209 = vld [vmem:[%s2 + $0x178] sm:$0xff]
  %v210 = vld [vmem:[%s2 + $0x180] sm:$0xff]
  %v211 = vld [vmem:[%s2 + $0x188] sm:$0x1]
  %v212 = vlaneseq
  %v213 = vshrl.u32 %v212, 7
  %v214 = vsub.s32 0, %v213
  %v215 = vrot.slane %v211, %v214
  %216 = vmatprep.subr.mxu0 0.0
  %217 = vmatpush1.msra.mxu0 %v195
  %218 = vmatprep.subr.mxu0 0.0
  %219 = vmatpush1.msra.mxu0 %v196
  %220 = vmatprep.subr.mxu0 0.0
  %221 = vmatpush1.msra.mxu0 %v197
  %222 = vmatprep.subr.mxu0 0.0
  %223 = vmatpush1.msra.mxu0 %v198
  %224 = vmatprep.subr.mxu0 0.0
  %225 = vmatpush1.msra.mxu0 %v199
  %226 = vmatprep.subr.mxu0 0.0
  %227 = vmatpush1.msra.mxu0 %v200
  %228 = vmatprep.subr.mxu0 0.0
  %229 = vmatpush1.msra.mxu0 %v201
  %230 = vmatprep.subr.mxu0 0.0
  %231 = vmatpush1.msra.mxu0 %v202
  %232 = vmatprep.subr.mxu0 0.0
  %233 = vmatpush1.msra.mxu0 %v203
  %234 = vmatprep.subr.mxu0 0.0
  %235 = vmatpush1.msra.mxu0 %v204
  %236 = vmatprep.subr.mxu0 0.0
  %237 = vmatpush1.msra.mxu0 %v205
  %238 = vmatprep.subr.mxu0 0.0
  %239 = vmatpush1.msra.mxu0 %v206
  %240 = vmatprep.subr.mxu0 0.0
  %241 = vmatpush1.msra.mxu0 %v207
  %242 = vmatprep.subr.mxu0 0.0
  %243 = vmatpush1.msra.mxu0 %v208
  %244 = vmatprep.subr.mxu0 0.0
  %245 = vmatpush1.msra.mxu0 %v209
  %246 = vmatprep.subr.mxu0 0.0
  %247 = vmatpush1.msra.mxu0 %v210
  %248 = vmatprep.subr.mxu0 0.0
  %249 = vmatpush1.msra.mxu0 0.0
  %250 = vmatprep.subr.mxu0 0.0
  %251 = vmatpush1.msra.mxu0 0.0
  %252 = vmatprep.subr.mxu0 0.0
  %253 = vmatpush1.msra.mxu0 0.0
  %254 = vmatprep.subr.mxu0 0.0
  %255 = vmatpush1.msra.mxu0 0.0
  %256 = vmatprep.subr.mxu0 0.0
  %257 = vmatpush1.msra.mxu0 0.0
  %258 = vmatprep.subr.mxu0 0.0
  %259 = vmatpush1.msra.mxu0 0.0
  %260 = vmatprep.subr.mxu0 0.0
  %261 = vmatpush1.msra.mxu0 0.0
  %262 = vmatprep.subr.mxu0 0.0
  %263 = vmatpush1.msra.mxu0 0.0
  %264 = vmatprep.subr.mxu0 0.0
  %265 = vmatpush1.msra.mxu0 0.0
  %266 = vmatprep.subr.mxu0 0.0
  %267 = vmatpush1.msra.mxu0 0.0
  %268 = vmatprep.subr.mxu0 0.0
  %269 = vmatpush1.msra.mxu0 0.0
  %270 = vmatprep.subr.mxu0 0.0
  %271 = vmatpush1.msra.mxu0 0.0
  %272 = vmatprep.subr.mxu0 0.0
  %273 = vmatpush1.msra.mxu0 0.0
  %274 = vmatprep.subr.mxu0 0.0
  %275 = vmatpush1.msra.mxu0 0.0
  %276 = vmatprep.subr.mxu0 0.0
  %277 = vmatpush1.msra.mxu0 0.0
  %278 = vmatprep.subr.mxu0 0.0
  %279 = vmatpush1.msra.mxu0 0.0
  %280 = vmatprep.mubr.f32.mxu0 0.0
  %281 = vmatmul.mubr.f32.gmra.mrb[0].mxu0 %v194
  %v282 = vpop.f32.mrb[0].mxu0
  %v283 = vadd.f32 %v215, %v282
  %v284 = vpop.f32.mrb[0].mxu0
  %285 = vdwg.mxu0
  %v286 = vmax.f32 %v283, 0.0
  %v287 = vld [vmem:[%s2 + $0x190] sm:$0xff]
  %v288 = vld [vmem:[%s2 + $0x198] sm:$0xff]
  %v289 = vld [vmem:[%s2 + $0x1a0] sm:$0xff]
  %v290 = vld [vmem:[%s2 + $0x1a8] sm:$0xff]
  %v291 = vld [vmem:[%s2 + $0x1b0] sm:$0xff]
  %v292 = vld [vmem:[%s2 + $0x1b8] sm:$0xff]
  %v293 = vld [vmem:[%s2 + $0x1c0] sm:$0xff]
  %v294 = vld [vmem:[%s2 + $0x1c8] sm:$0xff]
  %v295 = vld [vmem:[%s2 + $0x1d0] sm:$0xff]
  %v296 = vld [vmem:[%s2 + $0x1d8] sm:$0xff]
  %v297 = vld [vmem:[%s2 + $0x1e0] sm:$0xff]
  %v298 = vld [vmem:[%s2 + $0x1e8] sm:$0xff]
  %v299 = vld [vmem:[%s2 + $0x1f0] sm:$0xff]
  %v300 = vld [vmem:[%s2 + $0x1f8] sm:$0xff]
  %v301 = vld [vmem:[%s2 + $0x200] sm:$0xff]
  %v302 = vld [vmem:[%s2 + $0x208] sm:$0xff]
  %v303 = vld [vmem:[%s2 + $0x210] sm:$0x1]
  %v304 = vlaneseq
  %v305 = vshrl.u32 %v304, 7
  %v306 = vsub.s32 0, %v305
  %v307 = vrot.slane %v303, %v306
  %308 = vmatprep.subr.mxu0 0.0
  %309 = vmatpush1.msra.mxu0 %v287
  %310 = vmatprep.subr.mxu0 0.0
  %311 = vmatpush1.msra.mxu0 %v288
  %312 = vmatprep.subr.mxu0 0.0
  %313 = vmatpush1.msra.mxu0 %v289
  %314 = vmatprep.subr.mxu0 0.0
  %315 = vmatpush1.msra.mxu0 %v290
  %316 = vmatprep.subr.mxu0 0.0
  %317 = vmatpush1.msra.mxu0 %v291
  %318 = vmatprep.subr.mxu0 0.0
  %319 = vmatpush1.msra.mxu0 %v292
  %320 = vmatprep.subr.mxu0 0.0
  %321 = vmatpush1.msra.mxu0 %v293
  %322 = vmatprep.subr.mxu0 0.0
  %323 = vmatpush1.msra.mxu0 %v294
  %324 = vmatprep.subr.mxu0 0.0
  %325 = vmatpush1.msra.mxu0 %v295
  %326 = vmatprep.subr.mxu0 0.0
  %327 = vmatpush1.msra.mxu0 %v296
  %328 = vmatprep.subr.mxu0 0.0
  %329 = vmatpush1.msra.mxu0 %v297
  %330 = vmatprep.subr.mxu0 0.0
  %331 = vmatpush1.msra.mxu0 %v298
  %332 = vmatprep.subr.mxu0 0.0
  %333 = vmatpush1.msra.mxu0 %v299
  %334 = vmatprep.subr.mxu0 0.0
  %335 = vmatpush1.msra.mxu0 %v300
  %336 = vmatprep.subr.mxu0 0.0
  %337 = vmatpush1.msra.mxu0 %v301
  %338 = vmatprep.subr.mxu0 0.0
  %339 = vmatpush1.msra.mxu0 %v302
  %340 = vmatprep.subr.mxu0 0.0
  %341 = vmatpush1.msra.mxu0 0.0
  %342 = vmatprep.subr.mxu0 0.0
  %343 = vmatpush1.msra.mxu0 0.0
  %344 = vmatprep.subr.mxu0 0.0
  %345 = vmatpush1.msra.mxu0 0.0
  %346 = vmatprep.subr.mxu0 0.0
  %347 = vmatpush1.msra.mxu0 0.0
  %348 = vmatprep.subr.mxu0 0.0
  %349 = vmatpush1.msra.mxu0 0.0
  %350 = vmatprep.subr.mxu0 0.0
  %351 = vmatpush1.msra.mxu0 0.0
  %352 = vmatprep.subr.mxu0 0.0
  %353 = vmatpush1.msra.mxu0 0.0
  %354 = vmatprep.subr.mxu0 0.0
  %355 = vmatpush1.msra.mxu0 0.0
  %356 = vmatprep.subr.mxu0 0.0
  %357 = vmatpush1.msra.mxu0 0.0
  %358 = vmatprep.subr.mxu0 0.0
  %359 = vmatpush1.msra.mxu0 0.0
  %360 = vmatprep.subr.mxu0 0.0
  %361 = vmatpush1.msra.mxu0 0.0
  %362 = vmatprep.subr.mxu0 0.0
  %363 = vmatpush1.msra.mxu0 0.0
  %364 = vmatprep.subr.mxu0 0.0
  %365 = vmatpush1.msra.mxu0 0.0
  %366 = vmatprep.subr.mxu0 0.0
  %367 = vmatpush1.msra.mxu0 0.0
  %368 = vmatprep.subr.mxu0 0.0
  %369 = vmatpush1.msra.mxu0 0.0
  %370 = vmatprep.subr.mxu0 0.0
  %371 = vmatpush1.msra.mxu0 0.0
  %372 = vmatprep.mubr.f32.mxu0 0.0
  %373 = vmatmul.mubr.f32.gmra.mrb[0].mxu0 %v286
  %v374 = vpop.f32.mrb[0].mxu0
  %v375 = vadd.f32 %v307, %v374
  %v376 = vpop.f32.mrb[0].mxu0
  %377 = vdwg.mxu0
  %378 = vst [vmem:[%s3] sm:$0xff] %v375
  // Predicated region
  $region14: #{_multi_arg_regression_call.1} parent=0 // pred_check
    _
  $region15: #{_multi_arg_regression_call.1} parent=0 // pred_check_branch
    %380 = sbr.rel (0) target = $region17
  $region16: #{_multi_arg_regression_call.1} parent=0 // pred_region
    _
  $region17: #{_multi_arg_regression_call.1} parent=0 // pred_fallthru
    _
  // Predicated region
  $region18: #{_multi_arg_regression_call.1} parent=0 // pred_check
    _
  $region19: #{_multi_arg_regression_call.1} parent=0 // pred_check_branch
    %382 = sbr.rel (0) target = $region21
  $region20: #{_multi_arg_regression_call.1} parent=0 // pred_region
    _
  $region21: #{_multi_arg_regression_call.1} parent=0 // pred_fallthru
    _

</llo_original>
